<compile_context>
chip_gen: v6e
topology: v6e:2x2x1
jax: 0.10.0
libtpu: 0.0.40
codegen_flags: <defaults>
</compile_context>

<pallas_src>
import jax
import jax.numpy as jnp
from jax.experimental import pallas as pl
from jax.experimental.pallas import tpu as pltpu

_LANE = 128
# VMEM budget for the pipelined working set (2x in block + 2x out block).
# 24 MiB leaves headroom under the 32 MiB default scoped limit on every
# generation (v7x: 64 MiB physical).
_VMEM_BUDGET_BYTES = 24 * 1024 * 1024


def _kongjian_kernel(x_ref, w_ref, o_ref):
    # x_ref: (1, C, T_HW)   w_ref: (1, C) f32   o_ref: (1, C, T_HW)
    x = x_ref[0]                                  # (C, T_HW), native dtype
    w = w_ref[...]                                # (1, C), f32

    # 1x1 conv == channel reduction: (1,C) @ (C,T_HW) on the MXU, f32 acc.
    # (The cast is a no-op for f32 inputs; for low-precision x the MXU takes
    #  the narrow dtype natively.)
    w_mm = w if w.dtype == x.dtype else w.astype(x.dtype)
    y = jnp.dot(w_mm, x, preferred_element_type=jnp.float32)   # (1, T_HW) f32
    y = jax.nn.sigmoid(y)                                       # EUP

    # Final scale in x's native dtype; (1, T_HW) broadcasts over C sublanes.
    o_ref[0] = (x * y.astype(x.dtype)).astype(o_ref.dtype)


def _round_up(v, m):
    return (v + m - 1) // m * m


def kongjian_forward(x_nchw, weight):
    """Pallas forward of `kongjian`: out = x * sigmoid(conv1x1(x)).

    x_nchw: (B, C, H, W);  weight: (1, C, 1, 1) (PyTorch Conv2d layout).
    """
    B, C, H, W = x_nchw.shape
    HW = H * W
    dtype_bytes = jnp.dtype(x_nchw.dtype).itemsize

    # ---- pick a lane-dense spatial tile --------------------------------
    # Largest multiple of 128 such that 2 in-blocks + 2 out-blocks fit the
    # VMEM budget, clamped to the (lane-padded) problem size.
    max_lanes = _VMEM_BUDGET_BYTES // (4 * C * dtype_bytes)
    t_hw = max(_LANE, (max_lanes // _LANE) * _LANE)
    t_hw = min(t_hw, _round_up(HW, _LANE))
    hw_pad = _round_up(HW, t_hw)
    n_tiles = hw_pad // t_hw

    x_flat = x_nchw.reshape(B, C, HW)
    if hw_pad != HW:
        # Zero padding is harmless: padded columns give 0 * sigmoid(0) = 0 and
        # are sliced off below; it keeps every store full-width (no vst.msk).
        x_flat = jnp.pad(x_flat, ((0, 0), (0, 0), (0, hw_pad - HW)))

    # Keep the conv weight in f32 (matches PyTorch, which does not quantize
    # the weight to the activation dtype).
    w_flat = weight.reshape(1, C).astype(jnp.float32)

    block_bytes = C * t_hw * dtype_bytes
    vmem_limit = min(64 * 1024 * 1024,
                     max(32 * 1024 * 1024, 4 * block_bytes + (2 << 20)))

    out_flat = pl.pallas_call(
        _kongjian_kernel,
        out_shape=jax.ShapeDtypeStruct((B, C, hw_pad), x_nchw.dtype),
        grid_spec=pltpu.PrefetchScalarGridSpec(
            num_scalar_prefetch=0,
            grid=(B, n_tiles),
            in_specs=[
                pl.BlockSpec((1, C, t_hw), lambda b, s: (b, 0, s)),
                pl.BlockSpec((1, C), lambda b, s: (0, 0)),   # stays resident
            ],
            out_specs=pl.BlockSpec((1, C, t_hw), lambda b, s: (b, 0, s)),
        ),
        compiler_params=pltpu.CompilerParams(
            dimension_semantics=("parallel", "parallel"),
            vmem_limit_bytes=vmem_limit,
        ),
    )(x_flat, w_flat)

    if hw_pad != HW:
        out_flat = out_flat[:, :, :HW]
    return out_flat.reshape(B, C, H, W)


def _reference(x, weight):
    # Pure-JAX reference of the PyTorch forward.
    y = jnp.einsum('bchw,c->bhw', x, weight.reshape(-1))[:, None, :, :]
    y = jax.nn.sigmoid(y)
    return x * y


if __name__ == "__main__":
    key = jax.random.PRNGKey(0)
    kx, kw = jax.random.split(key)

    B, C, H, W = 2, 4, 16, 16
    x = jax.random.normal(kx, (B, C, H, W), dtype=jnp.float32)

    # Deterministic Conv2d(in_channel, 1, kernel_size=1, bias=False) weight:
    # shape (out=1, in=C, 1, 1), kaiming-uniform-like bound as in PyTorch.
    bound = 1.0 / (C ** 0.5)
    weight = jax.random.uniform(kw, (1, C, 1, 1), dtype=jnp.float32,
                                minval=-bound, maxval=bound)

    out = kongjian_forward(x, weight)
    jax.block_until_ready(out)

    ref = _reference(x, weight)
    assert out.shape == (B, C, H, W)
    assert jnp.allclose(out, ref, atol=1e-5, rtol=1e-5), "mismatch vs reference"

    print("KERNEL_OK")
</pallas_src>

<mosaic_0001>
module attributes {stable_mosaic.version = 11 : i64} {
  func.func @_kongjian_kernel(%arg0: i32, %arg1: i32, %arg2: memref<1x4x256xf32, #tpu.memory_space<vmem>>, %arg3: memref<1x4xf32, #tpu.memory_space<vmem>>, %arg4: memref<1x4x256xf32, #tpu.memory_space<vmem>>) attributes {dimension_semantics = [#tpu.dimension_semantics<parallel>, #tpu.dimension_semantics<parallel>], iteration_bounds = array<i64: 2, 1>, scalar_prefetch = 0 : i64, scratch_operands = 0 : i64, tpu.core_type = #tpu.core_type<tc>, window_params = [{transform_indices = @transform_0, window_bounds = array<i64: 1, 4, 256>}, {pipeline_mode = #tpu.pipeline_mode<synchronous>, transform_indices = @transform_1, window_bounds = array<i64: 1, 4>}, {transform_indices = @transform_2, window_bounds = array<i64: 1, 4, 256>}]} {
    %c0 = arith.constant 0 : index
    %c0_0 = arith.constant 0 : index
    %c0_1 = arith.constant 0 : index
    %0 = vector.load %arg2[%c0, %c0_0, %c0_1] : memref<1x4x256xf32, #tpu.memory_space<vmem>>, vector<1x4x256xf32>
    %1 = vector.shape_cast %0 : vector<1x4x256xf32> to vector<4x256xf32>
    %c0_2 = arith.constant 0 : index
    %c0_3 = arith.constant 0 : index
    %2 = vector.load %arg3[%c0_2, %c0_3] : memref<1x4xf32, #tpu.memory_space<vmem>>, vector<1x4xf32>
    %cst = arith.constant dense<0.000000e+00> : vector<1x256xf32>
    %3 = tpu.matmul %2, %1, %cst {dimension_numbers = #tpu.dot_dimension_numbers<[1], [0], [0], [1], [0, 0, 1, 1], [], []>} : vector<1x4xf32>, vector<4x256xf32>, vector<1x256xf32> -> vector<1x256xf32>
    %4 = arith.negf %3 : vector<1x256xf32>
    %5 = math.exp %4 : vector<1x256xf32>
    %cst_4 = arith.constant 1.000000e+00 : f32
    %6 = vector.broadcast %cst_4 : f32 to vector<1x256xf32>
    %7 = arith.addf %6, %5 : vector<1x256xf32>
    %8 = arith.divf %6, %7 : vector<1x256xf32>
    %9 = vector.broadcast %8 : vector<1x256xf32> to vector<4x256xf32>
    %10 = arith.mulf %1, %9 : vector<4x256xf32>
    %c0_5 = arith.constant 0 : index
    %c0_6 = arith.constant 0 : index
    %c0_7 = arith.constant 0 : index
    %11 = vector.load %arg4[%c0_5, %c0_6, %c0_7] : memref<1x4x256xf32, #tpu.memory_space<vmem>>, vector<1x4x256xf32>
    %12 = vector.shape_cast %11 : vector<1x4x256xf32> to vector<4x256xf32>
    %13 = vector.shape_cast %10 : vector<4x256xf32> to vector<1x4x256xf32>
    tpu.vector_store %arg4[%c0_5, %c0_6, %c0_7], %13 {strides = array<i32>} : memref<1x4x256xf32, #tpu.memory_space<vmem>>, vector<1x4x256xf32>,
    return
  }
  func.func @transform_0(%arg0: i32, %arg1: i32) -> (i32, i32, i32) {
    %c0_i32 = arith.constant 0 : i32
    %c0_i32_0 = arith.constant 0 : i32
    return %arg0, %c0_i32, %arg1 : i32, i32, i32
  }
  func.func @transform_1(%arg0: i32, %arg1: i32) -> (i32, i32) {
    %c0_i32 = arith.constant 0 : i32
    %c0_i32_0 = arith.constant 0 : i32
    %c0_i32_1 = arith.constant 0 : i32
    return %c0_i32, %c0_i32_0 : i32, i32
  }
  func.func @transform_2(%arg0: i32, %arg1: i32) -> (i32, i32, i32) {
    %c0_i32 = arith.constant 0 : i32
    %c0_i32_0 = arith.constant 0 : i32
    return %arg0, %c0_i32, %arg1 : i32, i32, i32
  }
}

</mosaic_0001>

<llo_original>
// kernel: tpu_custom_call.1
$region0: #{tpu_custom_call.1}
  #allocation0 [shape = 'u32[]', space=smem, size = 0x4, offset = 0x4, fixed_abs, tag = 'smem constant byte address 0x4 - core index']
  #allocation1 [shape = 'u32[144,128]{1,0:T(1,128)}', space=vmem, size = 0x12000, scoped, tag = 'internal scratch']
  %s0 = inlined_call_operand.hbm [shape: f32[2,4,256], index: 0, kind: input, shape index: {}]
  %s1 = inlined_call_operand.vmem [shape: f32[1,4], index: 1, kind: input, shape index: {}]
  %s2 = inlined_call_operand.hbm [shape: f32[2,4,256], index: 2, kind: output, shape index: {}]
  %s3 = sld [smem:[#allocation0]]
  $region45: #{tpu_custom_call.1} parent=0
    _
  %s5 = ssub.s32 1, %s3
  %s6 = scalar_select 0, %s5, %s3
  $region1: #{tpu_custom_call.1} parent=0
    #allocation2 [shape = 'u8[8192]{0}', space=vmem, size = 0x2000, scoped, tag = 'input window, operand 0']
    #allocation3 [shape = 's32[2]{0}', space=sflag, size = 0x8, scoped, tag = 'scoped memory for tpu_custom_call.1']
    #allocation4 [shape = 's32[2]{0}', space=sflag, size = 0x8, scoped, tag = 'scoped memory for tpu_custom_call.1']
    #allocation5 [shape = 'u8[8192]{0}', space=vmem, size = 0x2000, scoped, tag = 'output window, operand 0']
    %7 = vsyncpa [#allocation3], 0
    %s8 = scalar_lea.sflag [#allocation3], 1
    %9 = vsyncpa %s8, 0
    %10 = vsyncpa [#allocation4], 0
    %s11 = scalar_lea.sflag [#allocation4], 1
    %12 = vsyncpa %s11, 0
    loop: start=0, step=1, limit=4
    $region2: #{tpu_custom_call.1} parent=1 // loop_pre_header
      _
    $region3: #{tpu_custom_call.1} parent=1 // loop_header
      %s14 = sphi 0, %s18
      %p15 = scmp.ge.s32.totalorder %s14, 4
      %s21 = sphi 0, %s33
      %s22 = sphi 0, %s29
      %s23 = sphi 0, %s21
      %s24 = sphi 0, %s22
      %s25 = sphi 0, %s23
      %s26 = sphi 0, %s24
      %s38 = sphi 0, %s40
      %s41 = sphi 0, %s38
      %s42 = sphi 0, %s41
      %s58 = sphi 0, %s42
      %s62 = sphi 0, %s62
      %s64 = sphi 0, %s62
      %s65 = sphi 0, %s64
      %s79 = sphi 0, %s65
      %s87 = sphi 0, %s89
      %s90 = sphi 0, %s87
      %s91 = sphi 0, %s90
      %s107 = sphi 0, %s91
    $region4: #{tpu_custom_call.1} parent=1 // loop_header_branch
      %17 = sbr.rel (%p15) target = $region8
    $region5: #{tpu_custom_call.1} parent=1 // loop_body
      %s19 = ssub.s32 %s14, 1
      %s20 = ssub.s32 %s14, 2
      %s27 = sadd.s32 1, %s22
      %p28 = scmp.ge.s32.totalorder %s27, 1
      %s29 = scalar_select %p28, 0, %s27
      %s30 = sadd.s32 1, %s21
      %s31 = scalar_select %p28, %s30, %s21
      %p32 = scmp.ge.s32.totalorder %s31, 2
      %s33 = scalar_select %p32, 0, %s31
      %s34 = ssub.s32 %s21, %s33
      %s35 = ssub.s32 %s22, %s29
      %s36 = sor.u32 %s34, %s35
      %p37 = scmp.eq.s32.totalorder %s36, 0
      %s39 = sadd.s32 %s38, 1
      %s40 = scalar_select %p37, %s38, %s39
      %p43 = pneg %p37
      %p44 = scmp.eq.s32.totalorder %s14, 1
      %p45 = por %p43, %p44
      %p46 = scmp.ne.s32.totalorder %s38, %s41
      %p47 = scmp.eq.s32.totalorder %s14, 0
      %p48 = por %p46, %p47
      %p49 = scmp.ne.s32.totalorder %s38, %s41
      %p50 = scmp.eq.s32.totalorder %s19, 1
      %p51 = por %p49, %p50
      %p52 = scmp.ne.s32.totalorder %s41, %s42
      %p53 = scmp.eq.s32.totalorder %s19, 0
      %p54 = por %p52, %p53
      %p55 = scmp.ne.s32.totalorder %s41, %s42
      %p56 = scmp.eq.s32.totalorder %s20, 1
      %p57 = por %p55, %p56
      %p59 = scmp.ne.s32.totalorder %s42, %s58
      %p60 = scmp.eq.s32.totalorder %s20, 0
      %p61 = por %p59, %p60
      %s63 = sadd.s32 %s62, 1
      %p66 = scmp.eq.s32.totalorder %s14, 1
      %p67 = scmp.ne.s32.totalorder %s62, %s64
      %p68 = scmp.eq.s32.totalorder %s14, 0
      %p69 = por %p67, %p68
      %p70 = scmp.ne.s32.totalorder %s62, %s64
      %p71 = scmp.eq.s32.totalorder %s19, 1
      %p72 = por %p70, %p71
      %p73 = scmp.ne.s32.totalorder %s64, %s65
      %p74 = scmp.eq.s32.totalorder %s19, 0
      %p75 = por %p73, %p74
      %p76 = scmp.ne.s32.totalorder %s64, %s65
      %p77 = scmp.eq.s32.totalorder %s20, 1
      %p78 = por %p76, %p77
      %p80 = scmp.ne.s32.totalorder %s65, %s79
      %p81 = scmp.eq.s32.totalorder %s20, 0
      %p82 = por %p80, %p81
      %s83 = ssub.s32 %s21, %s33
      %s84 = ssub.s32 %s22, %s29
      %s85 = sor.u32 %s83, %s84
      %p86 = scmp.eq.s32.totalorder %s85, 0
      %s88 = sadd.s32 %s87, 1
      %s89 = scalar_select %p86, %s87, %s88
      %p92 = pneg %p86
      %p93 = scmp.eq.s32.totalorder %s14, 1
      %p94 = por %p92, %p93
      %p95 = scmp.ne.s32.totalorder %s87, %s90
      %p96 = scmp.eq.s32.totalorder %s14, 0
      %p97 = por %p95, %p96
      %p98 = scmp.ne.s32.totalorder %s87, %s90
      %p99 = scmp.eq.s32.totalorder %s19, 1
      %p100 = por %p98, %p99
      %p101 = scmp.ne.s32.totalorder %s90, %s91
      %p102 = scmp.eq.s32.totalorder %s19, 0
      %p103 = por %p101, %p102
      %p104 = scmp.ne.s32.totalorder %s90, %s91
      %p105 = scmp.eq.s32.totalorder %s20, 1
      %p106 = por %p104, %p105
      %p108 = scmp.ne.s32.totalorder %s91, %s107
      %p109 = scmp.eq.s32.totalorder %s20, 0
      %p110 = por %p108, %p109
      %p111 = scmp.le.s32.totalorder 1, %s14
      %p112 = scmp.lt.s32.totalorder %s14, 3
      %p113 = pnand %p111, %p112
      %p114 = pneg %p113
      // Predicated region
      $region9: #{tpu_custom_call.1} parent=5 // pred_check
        _
      $region10: #{tpu_custom_call.1} parent=5 // pred_check_branch
        %116 = sbr.rel (%p113) target = $region12
      $region11: #{tpu_custom_call.1} parent=5 // pred_region
        %s117 = ssub.s32 %s14, 1
        // Predicated region
        $region13: #{tpu_custom_call.1} parent=11 // pred_check
          %p118 = pneg %p75
        $region14: #{tpu_custom_call.1} parent=11 // pred_check_branch
          %120 = sbr.rel (%p118) target = $region16
        $region15: #{tpu_custom_call.1} parent=11 // pred_region
          _
        $region16: #{tpu_custom_call.1} parent=11 // pred_fallthru
          _
      $region12: #{tpu_custom_call.1} parent=5 // pred_fallthru
        _
      %p121 = scmp.lt.s32.totalorder %s14, 2
      // Predicated region
      $region17: #{tpu_custom_call.1} parent=5 // pred_check
        %p122 = pneg %p121
      $region18: #{tpu_custom_call.1} parent=5 // pred_check_branch
        %124 = sbr.rel (%p122) target = $region20
      $region19: #{tpu_custom_call.1} parent=5 // pred_region
        // Predicated region
        $region21: #{tpu_custom_call.1} parent=19 // pred_check
          %p125 = pneg %p48
        $region22: #{tpu_custom_call.1} parent=19 // pred_check_branch
          %127 = sbr.rel (%p125) target = $region24
        $region23: #{tpu_custom_call.1} parent=19 // pred_region
          %s128 = sand.u32 %s38, 1
          %s129 = scalar_lea.sflag [#allocation3], %s128
          %s130 = sand.u32 %s38, 1
          %s131 = smul.addr %s130, 8
          %s132 = scalar_lea.vmem [#allocation2], %s131
          %s133 = smul.u32 2, %s22
          %s135 = ssub.s32 128, 128
          %136 = vsyncadd %s129, %s135
          %s137 = smul.addr %s21, 2
          %s138 = sadd.s32 %s133, %s137
          %s139 = smul.addr %s138, 64
          %s140 = scalar_lea.hbm %s0, %s139
          %s142 = sshll.u32 %s132, 4
          %s143 = int_to_ptr.vmem [resolvable:$true] %s142
          %145 = dma.hbm_to_vmem [thread:$0]  %s140, 128, %s143, %s129
        $region24: #{tpu_custom_call.1} parent=19 // pred_fallthru
          _
      $region20: #{tpu_custom_call.1} parent=5 // pred_fallthru
        _
      %p146 = scmp.le.s32.totalorder 1, %s14
      %p147 = scmp.lt.s32.totalorder %s14, 3
      %p148 = pnand %p146, %p147
      %p149 = pneg %p148
      // Predicated region
      $region25: #{tpu_custom_call.1} parent=5 // pred_check
        _
      $region26: #{tpu_custom_call.1} parent=5 // pred_check_branch
        %151 = sbr.rel (%p148) target = $region28
      $region27: #{tpu_custom_call.1} parent=5 // pred_region
        %s152 = ssub.s32 %s14, 1
        %s153 = sand.u32 %s41, 1
        %s154 = scalar_lea.sflag [#allocation3], %s153
        %s155 = sand.u32 %s41, 1
        %s156 = smul.addr %s155, 8
        %s157 = scalar_lea.vmem [#allocation2], %s156
        // Predicated region
        $region29: #{tpu_custom_call.1} parent=27 // pred_check
          %p158 = pneg %p54
        $region30: #{tpu_custom_call.1} parent=27 // pred_check_branch
          %160 = sbr.rel (%p158) target = $region32
        $region31: #{tpu_custom_call.1} parent=27 // pred_region
          %161 = dma.done %s154, 128
        $region32: #{tpu_custom_call.1} parent=27 // pred_fallthru
          _
        %s162 = sand.u32 %s41, 1
        %s163 = scalar_lea.sflag [#allocation3], %s162
        %s164 = sand.u32 %s41, 1
        %s165 = smul.addr %s164, 8
        %s166 = scalar_lea.vmem [#allocation2], %s165
        %p167 = pneg %p54
        %p168 = pneg %p51
        %p169 = pneg %p75
        %p170 = pneg %p72
        %p171 = pneg %p103
        %p172 = pneg %p100
        %s173 = sand.u32 %s90, 1
        %s174 = scalar_lea.sflag [#allocation4], %s173
        %s175 = sand.u32 %s90, 1
        %s176 = smul.addr %s175, 8
        %s177 = scalar_lea.vmem [#allocation5], %s176
        %s178 = smul.u32 2, %s24
        %s179 = smul.u32 2, %s24
        %v180 = vld [vmem:[%s157] sm:$0xff]
        %v181 = vld [vmem:[%s1] sm:$0x1]
        %v183 = vcombine.high %v180, %v180
        %vm184 = vcmask 31744
        %v186 = vsel %vm184, %v181, 0
        %vm188 = vcmask 1043456
        %v189 = vsel %vm188, %v180, 0
        %v191 = vsel %vm188, %v183, 0
        %193 = vmatprep.subr.mxu0 0.0
        %194 = vmatpush1.msra.mxu0 0.0
        %195 = vmatprep.subr.mxu0 0.0
        %196 = vmatpush1.msra.mxu0 0.0
        %197 = vmatprep.subr.mxu0 0.0
        %198 = vmatpush1.msra.mxu0 0.0
        %199 = vmatprep.subr.mxu0 0.0
        %200 = vmatpush1.msra.mxu0 0.0
        %201 = vmatprep.subr.mxu0 0.0
        %202 = vmatpush1.msra.mxu0 0.0
        %203 = vmatprep.subr.mxu0 0.0
        %204 = vmatpush1.msra.mxu0 0.0
        %205 = vmatprep.subr.mxu0 0.0
        %206 = vmatpush1.msra.mxu0 0.0
        %207 = vmatprep.subr.mxu0 0.0
        %208 = vmatpush1.msra.mxu0 0.0
        %209 = vmatprep.subr.mxu0 0.0
        %210 = vmatpush1.msra.mxu0 0.0
        %211 = vmatprep.subr.mxu0 0.0
        %212 = vmatpush1.msra.mxu0 0.0
        %213 = vmatprep.subr.mxu0 0.0
        %214 = vmatpush1.msra.mxu0 0.0
        %215 = vmatprep.subr.mxu0 0.0
        %216 = vmatpush1.msra.mxu0 0.0
        %217 = vmatprep.subr.mxu0 0.0
        %218 = vmatpush1.msra.mxu0 0.0
        %219 = vmatprep.subr.mxu0 0.0
        %220 = vmatpush1.msra.mxu0 0.0
        %221 = vmatprep.subr.mxu0 0.0
        %222 = vmatpush1.msra.mxu0 0.0
        %223 = vmatprep.subr.mxu0 %v191
        %224 = vmatpush1.msra.mxu0 %v189
        %225 = vmatprep.subr.mxu0 0.0
        %226 = vmatpush2.msra.mxu0 0.0
        %227 = vmatprep.subr.mxu0 0.0
        %228 = vmatpush2.msra.mxu0 0.0
        %229 = vmatprep.subr.mxu0 0.0
        %230 = vmatpush2.msra.mxu0 0.0
        %231 = vmatprep.subr.mxu0 0.0
        %232 = vmatpush2.msra.mxu0 0.0
        %233 = vmatprep.subr.mxu0 0.0
        %234 = vmatpush2.msra.mxu0 0.0
        %235 = vmatprep.subr.mxu0 0.0
        %236 = vmatpush2.msra.mxu0 0.0
        %237 = vmatprep.subr.mxu0 0.0
        %238 = vmatpush2.msra.mxu0 0.0
        %239 = vmatprep.subr.mxu0 0.0
        %240 = vmatpush2.msra.mxu0 0.0
        %241 = vmatprep.subr.mxu0 0.0
        %242 = vmatpush2.msra.mxu0 0.0
        %243 = vmatprep.subr.mxu0 0.0
        %244 = vmatpush2.msra.mxu0 0.0
        %245 = vmatprep.subr.mxu0 0.0
        %246 = vmatpush2.msra.mxu0 0.0
        %247 = vmatprep.subr.mxu0 0.0
        %248 = vmatpush2.msra.mxu0 0.0
        %249 = vmatprep.subr.mxu0 0.0
        %250 = vmatpush2.msra.mxu0 0.0
        %251 = vmatprep.subr.mxu0 0.0
        %252 = vmatpush2.msra.mxu0 0.0
        %253 = vmatprep.subr.mxu0 0.0
        %254 = vmatpush2.msra.mxu0 0.0
        %255 = vmatprep.subr.mxu0 0.0
        %256 = vmatpush2.msra.mxu0 0.0
        %257 = vmatprep.mubr.f32.mxu0 0.0
        %258 = vmatmul.mubr.f32.gmra.mxu0 %v186
        %v259 = vpop.f32.mrf.mxu0
        %v260 = vadd.f32 0.0, %v259
        %v261 = vpop.f32.mrf.mxu0
        %v262 = vadd.f32 0.0, %v261
        %263 = vdwg.mxu0
        %v264 = vxor.u32 %v260, 2147483648
        %v265 = vxor.u32 %v262, 2147483648
        %v266 = vmul.f32 %v264, 1.442695
        %v267 = vpow.pop %v266
        %v268 = vmul.f32 %v265, 1.442695
        %v269 = vpow.pop %v268
        %v270 = vadd.f32 %v267, 1.0
        %v271 = vadd.f32 %v269, 1.0
        %v272 = vrcp.pop %v270
        %v273 = vmul.f32 1.0, %v272
        %v274 = vrcp.pop %v271
        %v275 = vmul.f32 1.0, %v274
        %v276 = vlaneseq
        %v277 = vshrl.u32 %v276, 7
        %v278 = vsub.s32 0, %v277
        %v279 = vrot.slane %v273, %v278
        %v280 = vlaneseq
        %v281 = vshrl.u32 %v280, 7
        %v282 = vsub.s32 0, %v281
        %v283 = vrot.slane %v275, %v282
        %v286 = vcombine.low %v279, %v283
        %v288 = vmul.f32 %v180, %v286
        %289 = vst [vmem:[%s177] sm:$0xff] %v288
        %s290 = sand.u32 %s90, 1
        %s291 = scalar_lea.sflag [#allocation4], %s290
        %s292 = sand.u32 %s90, 1
        %s293 = smul.addr %s292, 8
        %s294 = scalar_lea.vmem [#allocation5], %s293
        // Predicated region
        $region33: #{tpu_custom_call.1} parent=27 // pred_check
          %p295 = pneg %p100
        $region34: #{tpu_custom_call.1} parent=27 // pred_check_branch
          %297 = sbr.rel (%p295) target = $region36
        $region35: #{tpu_custom_call.1} parent=27 // pred_region
          %s298 = smul.u32 2, %s24
          %s300 = ssub.s32 128, 128
          %301 = vsyncadd %s291, %s300
          %s302 = smul.addr %s23, 2
          %s303 = sadd.s32 %s298, %s302
          %s304 = smul.addr %s303, 64
          %s305 = scalar_lea.hbm %s2, %s304
          %s307 = sshll.u32 %s294, 4
          %s308 = int_to_ptr.vmem [resolvable:$true] %s307
          %310 = dma.vmem_to_hbm [thread:$0]  %s308, 128, %s305, %s291
        $region36: #{tpu_custom_call.1} parent=27 // pred_fallthru
          _
      $region28: #{tpu_custom_call.1} parent=5 // pred_fallthru
        _
      %p311 = scmp.le.s32.totalorder 2, %s14
      // Predicated region
      $region37: #{tpu_custom_call.1} parent=5 // pred_check
        %p312 = pneg %p311
      $region38: #{tpu_custom_call.1} parent=5 // pred_check_branch
        %314 = sbr.rel (%p312) target = $region40
      $region39: #{tpu_custom_call.1} parent=5 // pred_region
        %s315 = ssub.s32 %s14, 2
        // Predicated region
        $region41: #{tpu_custom_call.1} parent=39 // pred_check
          %p316 = pneg %p106
        $region42: #{tpu_custom_call.1} parent=39 // pred_check_branch
          %318 = sbr.rel (%p316) target = $region44
        $region43: #{tpu_custom_call.1} parent=39 // pred_region
          %s319 = sand.u32 %s91, 1
          %s320 = scalar_lea.sflag [#allocation4], %s319
          %s321 = sand.u32 %s91, 1
          %s322 = smul.addr %s321, 8
          %s323 = scalar_lea.vmem [#allocation5], %s322
          %324 = dma.done %s320, 128
        $region44: #{tpu_custom_call.1} parent=39 // pred_fallthru
          _
      $region40: #{tpu_custom_call.1} parent=5 // pred_fallthru
        _
    $region6: #{tpu_custom_call.1} parent=1 // loop_footer
      %s18 = sadd.s32 1, %s14
    $region7: #{tpu_custom_call.1} parent=1 // loop_footer_branch
      %13 = sbr.rel target = $region3
    $region8: #{tpu_custom_call.1} parent=1 // loop_exit
      _
    %325 = vsyncpa [#allocation3], 1
    %s326 = scalar_lea.sflag [#allocation3], 1
    %327 = vsyncpa %s326, 1
    %328 = vsyncpa [#allocation4], 1
    %s329 = scalar_lea.sflag [#allocation4], 1
    %330 = vsyncpa %s329, 1

</llo_original>
